<compile_context>
chip_gen: v6e
topology: v6e:2x2x1
jax: 0.10.0
libtpu: 0.0.40
codegen_flags: <defaults>
</compile_context>

<pallas_src>
import functools

import jax
import jax.numpy as jnp
from jax.experimental import pallas as pl
from jax.experimental.pallas import tpu as pltpu

LN_EPS = 1e-5


def _round_up(x, m):
    return (x + m - 1) // m * m


def _largest_aligned_divisor(d_model, target):
    """Largest multiple of 128 that divides d_model and is <= target."""
    best = 128
    for c in range(128, min(target, d_model) + 1, 128):
        if d_model % c == 0:
            best = c
    return best


def _vmem_capacity_bytes():
    try:
        info = pltpu.get_tpu_info()
        cap = getattr(info, "vmem_capacity_bytes", None)
        if cap:
            return int(cap)
    except Exception:
        pass
    return 128 * 2 ** 20


def _device_kind():
    try:
        return jax.devices()[0].device_kind.lower()
    except Exception:
        return ""


def sublayer_connection_kernel(x_ref, gamma_ref, beta_ref, w_ref, b_ref, o_ref,
                               *scratch, tile_cols, cache_ln):
    """One (row-tile, col-tile) step of  out = x + (LN(x) @ W + b)."""
    j = pl.program_id(1)
    d_model = x_ref.shape[-1]
    split = tile_cols != d_model

    def layer_norm():
        # Two-pass statistics (mean, then sum of (x-mean)^2). Runs at most once
        # per row tile; reductions go to VPU/XLU which have slack under the MXU.
        xf = x_ref[...].astype(jnp.float32)
        inv_d = 1.0 / d_model
        mean = jnp.sum(xf, axis=-1, keepdims=True) * inv_d
        diff = xf - mean
        var = jnp.sum(diff * diff, axis=-1, keepdims=True) * inv_d  # biased, matches nn.LayerNorm
        rstd = jax.lax.rsqrt(var + LN_EPS)
        return diff * rstd * gamma_ref[...] + beta_ref[...]

    if cache_ln:
        # LN once per row tile (column index 0); bf16 result cached in VMEM scratch
        # and reused for every output-column tile.  NOTE: relies on the column axis
        # being the innermost ("arbitrary") grid axis so j == 0 runs first per row
        # tile on each core — do not reorder the grid or parallelize axis 1 here.
        ln_ref = scratch[0]

        @pl.when(j == 0)
        def _():
            ln_ref[...] = layer_norm().astype(ln_ref.dtype)

        ln = ln_ref[...]
    else:
        # Single-row-tile (decode) or single-column-tile grids: recompute LN each
        # step so both grid axes can be "parallel" (keeps both v7x TCs busy).
        ln = layer_norm().astype(jnp.bfloat16)

    # sublayer: Linear(d_model, d_model) column tile on the MXU, f32 accumulate.
    sub = jnp.dot(ln, w_ref[...], preferred_element_type=jnp.float32) + b_ref[...]

    # dropout(p=0.0) is identity; residual slices the already-resident x row tile.
    # tile_cols is a multiple of 128 whenever split is True -> lane-aligned, free.
    if split:
        start = pl.multiple_of(j * tile_cols, 128)
        xres = x_ref[:, pl.ds(start, tile_cols)]
    else:
        xres = x_ref[...]
    o_ref[...] = (xres.astype(jnp.float32) + sub).astype(o_ref.dtype)


def sublayer_connection(x, gamma, beta, w, b, *, tile_rows=None, tile_cols=None):
    """x: (..., D). gamma/beta/b: (D,). w: (D, D). Returns x's shape/dtype."""
    orig_shape = x.shape
    d_model = orig_shape[-1]
    if d_model % 128 != 0:
        # TODO(synk): a padded-d_model path (masked LN statistics + output slice)
        # could support non-lane-aligned models; error loudly instead of silently
        # falling into masked-partial-store layouts.
        raise ValueError(f"d_model={d_model} must be a multiple of 128 (lane width)")

    x2 = x.reshape(-1, d_model)
    n_rows = x2.shape[0]
    xb = x2.dtype.itemsize
    ob = jnp.dtype(x.dtype).itemsize

    kind = _device_kind()
    vmem_cap = _vmem_capacity_bytes()
    budget = max(int(0.40 * vmem_cap), 16 * 2 ** 20)   # generation-aware VMEM budget

    # ---- tile geometry -------------------------------------------------------
    if tile_cols is None:
        if d_model <= 512:
            tile_cols = d_model
        else:
            # v7x (64 MiB VMEM/TC): narrower weight tiles for very large D so the
            # double-buffered (D, tile_cols) weight stream fits; v5e/v6e: 512 wide.
            target = 256 if (vmem_cap <= 64 * 2 ** 20 and d_model >= 4096) else 512
            tile_cols = _largest_aligned_divisor(d_model, target)
    if not (d_model % tile_cols == 0 and (tile_cols % 128 == 0 or tile_cols == d_model)):
        raise ValueError("tile_cols must be a lane-aligned divisor of d_model")

    align = 16 if xb <= 2 else 8          # packed-sublane alignment for bf16 activations
    if tile_rows is None:
        if "v5" in kind:
            row_cap = 256                 # v5e: already at/above ridge; keep VMEM/vst low
        else:
            row_cap = 1024 if xb <= 2 else 512   # v6e/v7x: bigger rows cut W re-streaming
        per_row = 2 * d_model * xb + 2 * tile_cols * ob + d_model * 2
        fixed = 2 * d_model * tile_cols * 2 + 16 * d_model * 4
        fit = max(align, (budget - fixed) // per_row)
        tile_rows = int(min(row_cap, fit, _round_up(n_rows, align)))
        tile_rows = max(align, (tile_rows // align) * align)
    if not (tile_rows % 8 == 0 or tile_rows == n_rows):
        raise ValueError("tile_rows must be a multiple of 8 (or equal n_rows)")

    n_row_tiles = int(pl.cdiv(n_rows, tile_rows))
    n_col_tiles = d_model // tile_cols
    grid = (n_row_tiles, n_col_tiles)

    cache_ln = (n_col_tiles > 1) and (n_row_tiles > 1)
    use_buffered3 = (n_row_tiles > 1) and (n_col_tiles <= 2)

    # ---- params: 2-D blocks; weight in bf16 for the MXU fast path -------------
    gamma2 = gamma.reshape(1, d_model).astype(jnp.float32)
    beta2 = beta.reshape(1, d_model).astype(jnp.float32)
    b2 = b.reshape(1, d_model).astype(jnp.float32)
    w2 = w if w.dtype == jnp.bfloat16 else w.astype(jnp.bfloat16)

    # ---- specs -----------------------------------------------------------------
    # x's block index only changes with i; triple-buffer when the column loop is
    # short so the (tile_rows, D) DMA for row tile i+1 stays hidden.
    x_spec = pl.BlockSpec((tile_rows, d_model), lambda i, j: (i, 0))
    if use_buffered3:
        try:
            x_spec = pl.BlockSpec((tile_rows, d_model), lambda i, j: (i, 0),
                                  pipeline_mode=pl.Buffered(3))
        except TypeError:
            pass  # older BlockSpec signature: keep default double-buffering

    in_specs = [
        x_spec,
        pl.BlockSpec((1, d_model), lambda i, j: (0, 0)),          # gamma
        pl.BlockSpec((1, d_model), lambda i, j: (0, 0)),          # beta
        pl.BlockSpec((d_model, tile_cols), lambda i, j: (0, j)),  # W column tile
        pl.BlockSpec((1, tile_cols), lambda i, j: (0, j)),        # bias tile
    ]
    inputs = [x2, gamma2, beta2, w2, b2]

    scratch_shapes = ([pltpu.VMEM((tile_rows, d_model), jnp.bfloat16)]
                      if cache_ln else [])

    # ---- VMEM budget / cost hints ----------------------------------------------
    n_x_buf = 3 if use_buffered3 else 2
    vmem_est = (n_x_buf * tile_rows * d_model * xb          # x row tiles
                + 2 * d_model * tile_cols * 2               # bf16 W tiles (double-buf)
                + 2 * tile_rows * tile_cols * ob            # out tiles
                + (tile_rows * d_model * 2 if cache_ln else 0)  # LN scratch
                + 4 * d_model * 4 + 4 * tile_cols * 4)      # gamma/beta/bias blocks
    vmem_limit = int(min(max(int(1.3 * vmem_est), 16 * 2 ** 20),
                         int(0.85 * vmem_cap)))

    cost = pl.CostEstimate(
        flops=2 * n_rows * d_model * d_model + 10 * n_rows * d_model,
        transcendentals=n_rows,                               # one rsqrt per row
        bytes_accessed=(x2.size * xb                          # x read once (residual deduped)
                        + n_row_tiles * d_model * d_model * 2  # W re-streamed per row tile
                        + n_rows * d_model * ob               # output
                        + 3 * d_model * 4),
    )

    kernel = functools.partial(sublayer_connection_kernel,
                               tile_cols=tile_cols, cache_ln=cache_ln)
    dims = ("parallel", "arbitrary") if cache_ln else ("parallel", "parallel")

    out = pl.pallas_call(
        kernel,
        out_shape=jax.ShapeDtypeStruct((n_rows, d_model), x.dtype),
        grid_spec=pltpu.PrefetchScalarGridSpec(
            num_scalar_prefetch=0,
            grid=grid,
            in_specs=in_specs,
            out_specs=pl.BlockSpec((tile_rows, tile_cols), lambda i, j: (i, j)),
            scratch_shapes=scratch_shapes,
        ),
        compiler_params=pltpu.CompilerParams(
            dimension_semantics=dims,
            vmem_limit_bytes=vmem_limit,
        ),
        cost_estimate=cost,
    )(*inputs)
    return out.reshape(orig_shape)


def _reference(x, gamma, beta, w, b):
    xf = x.astype(jnp.float32)
    mean = jnp.mean(xf, axis=-1, keepdims=True)
    var = jnp.mean((xf - mean) ** 2, axis=-1, keepdims=True)
    ln = (xf - mean) * jax.lax.rsqrt(var + LN_EPS) * gamma + beta
    # mirror the kernel's bf16 MXU operands with f32 accumulation (documented
    # tolerance vs an all-f32 PyTorch Linear)
    ln_bf = ln.astype(jnp.bfloat16).astype(jnp.float32)
    sub = ln_bf @ w.astype(jnp.float32) + b.astype(jnp.float32)
    return (xf + sub).astype(x.dtype)


if __name__ == "__main__":
    key = jax.random.PRNGKey(0)
    B, S, D = 2, 64, 256  # small, but lane/MXU aligned (D multiple of 128)

    kx, kw, kb = jax.random.split(key, 3)
    x = jax.random.normal(kx, (B, S, D), dtype=jnp.float32)

    # nn.LayerNorm(d_model) init
    gamma = jnp.ones((D,), dtype=jnp.float32)
    beta = jnp.zeros((D,), dtype=jnp.float32)

    # deterministic synthetic sublayer: Linear(D, D); weight kept in bf16 so the
    # wrapper does not materialize an extra converted copy in HBM.
    w = (jax.random.normal(kw, (D, D), dtype=jnp.float32) / jnp.sqrt(D)).astype(jnp.bfloat16)
    b = jax.random.normal(kb, (D,), dtype=jnp.float32) * 0.01

    ref = _reference(x, gamma, beta, w, b)

    # default geometry: single block at this size (LN computed inline, no split)
    out0 = jax.block_until_ready(sublayer_connection(x, gamma, beta, w, b))
    # 2x2 grid: exercises LN caching across column tiles, the lane-aligned
    # residual slice of the resident x tile, and Buffered(3) x pipelining
    out1 = jax.block_until_ready(
        sublayer_connection(x, gamma, beta, w, b, tile_rows=64, tile_cols=128))
    # single row tile, multiple column tiles: exercises the LN-recompute
    # ("parallel","parallel") path used for small-batch decode on v7x dual-TC
    out2 = jax.block_until_ready(
        sublayer_connection(x, gamma, beta, w, b, tile_rows=128, tile_cols=128))

    for out in (out0, out1, out2):
        assert out.shape == x.shape and out.dtype == x.dtype
        assert jnp.allclose(out, ref, atol=5e-3, rtol=5e-3), "mismatch vs reference"
    assert jnp.allclose(out0, out1, atol=5e-3, rtol=5e-3)
    assert jnp.allclose(out0, out2, atol=5e-3, rtol=5e-3)

    # TODO(synk): the module's decoder/embedder/generator are injected nn.Modules
    # with no definition in the spec; this kernel implements the fused residual
    # SublayerConnection they compose. Dropout with p>0 would use pltpu.prng_seed /
    # pltpu.prng_random_bits; the module default p=0.0 is an exact identity.
    print("KERNEL_OK")
</pallas_src>

<mosaic_0001>
module attributes {stable_mosaic.version = 11 : i64} {
  func.func @sublayer_connection_kernel(%arg0: i32, %arg1: i32, %arg2: memref<128x256xf32, #tpu.memory_space<vmem>>, %arg3: memref<1x256xf32, #tpu.memory_space<vmem>>, %arg4: memref<1x256xf32, #tpu.memory_space<vmem>>, %arg5: memref<256x256xbf16, #tpu.memory_space<vmem>>, %arg6: memref<1x256xf32, #tpu.memory_space<vmem>>, %arg7: memref<128x256xf32, #tpu.memory_space<vmem>>) attributes {dimension_semantics = [#tpu.dimension_semantics<parallel>, #tpu.dimension_semantics<parallel>], iteration_bounds = array<i64: 1, 1>, scalar_prefetch = 0 : i64, scratch_operands = 0 : i64, tpu.core_type = #tpu.core_type<tc>, window_params = [{transform_indices = @transform_0, window_bounds = array<i64: 128, 256>}, {pipeline_mode = #tpu.pipeline_mode<synchronous>, transform_indices = @transform_1, window_bounds = array<i64: 1, 256>}, {pipeline_mode = #tpu.pipeline_mode<synchronous>, transform_indices = @transform_2, window_bounds = array<i64: 1, 256>}, {transform_indices = @transform_3, window_bounds = array<i64: 256, 256>}, {transform_indices = @transform_4, window_bounds = array<i64: 1, 256>}, {transform_indices = @transform_5, window_bounds = array<i64: 128, 256>}]} {
    %c0 = arith.constant 0 : index
    %c0_0 = arith.constant 0 : index
    %0 = vector.load %arg2[%c0, %c0_0] : memref<128x256xf32, #tpu.memory_space<vmem>>, vector<128x256xf32>
    %cst = arith.constant dense<0.000000e+00> : vector<128xf32>
    %1 = vector.multi_reduction <add>, %0, %cst [1] : vector<128x256xf32> to vector<128xf32>
    %2 = vector.shape_cast %1 : vector<128xf32> to vector<128x1xf32>
    %cst_1 = arith.constant 3.906250e-03 : f32
    %3 = vector.broadcast %cst_1 : f32 to vector<128x1xf32>
    %4 = arith.mulf %2, %3 : vector<128x1xf32>
    %5 = vector.broadcast %4 : vector<128x1xf32> to vector<128x256xf32>
    %6 = arith.subf %0, %5 : vector<128x256xf32>
    %7 = arith.mulf %6, %6 : vector<128x256xf32>
    %cst_2 = arith.constant dense<0.000000e+00> : vector<128xf32>
    %8 = vector.multi_reduction <add>, %7, %cst_2 [1] : vector<128x256xf32> to vector<128xf32>
    %9 = vector.shape_cast %8 : vector<128xf32> to vector<128x1xf32>
    %cst_3 = arith.constant 3.906250e-03 : f32
    %10 = vector.broadcast %cst_3 : f32 to vector<128x1xf32>
    %11 = arith.mulf %9, %10 : vector<128x1xf32>
    %cst_4 = arith.constant 9.99999974E-6 : f32
    %12 = vector.broadcast %cst_4 : f32 to vector<128x1xf32>
    %13 = arith.addf %11, %12 : vector<128x1xf32>
    %14 = math.rsqrt %13 : vector<128x1xf32>
    %15 = vector.broadcast %14 : vector<128x1xf32> to vector<128x256xf32>
    %16 = arith.mulf %6, %15 : vector<128x256xf32>
    %c0_5 = arith.constant 0 : index
    %c0_6 = arith.constant 0 : index
    %17 = vector.load %arg3[%c0_5, %c0_6] : memref<1x256xf32, #tpu.memory_space<vmem>>, vector<1x256xf32>
    %18 = vector.broadcast %17 : vector<1x256xf32> to vector<128x256xf32>
    %19 = arith.mulf %16, %18 : vector<128x256xf32>
    %c0_7 = arith.constant 0 : index
    %c0_8 = arith.constant 0 : index
    %20 = vector.load %arg4[%c0_7, %c0_8] : memref<1x256xf32, #tpu.memory_space<vmem>>, vector<1x256xf32>
    %21 = vector.broadcast %20 : vector<1x256xf32> to vector<128x256xf32>
    %22 = arith.addf %19, %21 : vector<128x256xf32>
    %23 = arith.truncf %22 : vector<128x256xf32> to vector<128x256xbf16>
    %c0_9 = arith.constant 0 : index
    %c0_10 = arith.constant 0 : index
    %24 = vector.load %arg5[%c0_9, %c0_10] : memref<256x256xbf16, #tpu.memory_space<vmem>>, vector<256x256xbf16>
    %cst_11 = arith.constant dense<0.000000e+00> : vector<128x256xf32>
    %25 = tpu.matmul %23, %24, %cst_11 {dimension_numbers = #tpu.dot_dimension_numbers<[1], [0], [0], [1], [0, 0, 1, 1], [], []>} : vector<128x256xbf16>, vector<256x256xbf16>, vector<128x256xf32> -> vector<128x256xf32>
    %c0_12 = arith.constant 0 : index
    %c0_13 = arith.constant 0 : index
    %26 = vector.load %arg6[%c0_12, %c0_13] : memref<1x256xf32, #tpu.memory_space<vmem>>, vector<1x256xf32>
    %27 = vector.broadcast %26 : vector<1x256xf32> to vector<128x256xf32>
    %28 = arith.addf %25, %27 : vector<128x256xf32>
    %c0_14 = arith.constant 0 : index
    %c0_15 = arith.constant 0 : index
    %29 = vector.load %arg2[%c0_14, %c0_15] : memref<128x256xf32, #tpu.memory_space<vmem>>, vector<128x256xf32>
    %30 = arith.addf %29, %28 : vector<128x256xf32>
    %c0_16 = arith.constant 0 : index
    %c0_17 = arith.constant 0 : index
    %31 = vector.load %arg7[%c0_16, %c0_17] : memref<128x256xf32, #tpu.memory_space<vmem>>, vector<128x256xf32>
    tpu.vector_store %arg7[%c0_16, %c0_17], %30 {strides = array<i32>} : memref<128x256xf32, #tpu.memory_space<vmem>>, vector<128x256xf32>,
    return
  }
  func.func @transform_0(%arg0: i32, %arg1: i32) -> (i32, i32) {
    %c0_i32 = arith.constant 0 : i32
    %c0_i32_0 = arith.constant 0 : i32
    return %arg0, %c0_i32 : i32, i32
  }
  func.func @transform_1(%arg0: i32, %arg1: i32) -> (i32, i32) {
    %c0_i32 = arith.constant 0 : i32
    %c0_i32_0 = arith.constant 0 : i32
    %c0_i32_1 = arith.constant 0 : i32
    return %c0_i32, %c0_i32_0 : i32, i32
  }
  func.func @transform_2(%arg0: i32, %arg1: i32) -> (i32, i32) {
    %c0_i32 = arith.constant 0 : i32
    %c0_i32_0 = arith.constant 0 : i32
    %c0_i32_1 = arith.constant 0 : i32
    return %c0_i32, %c0_i32_0 : i32, i32
  }
  func.func @transform_3(%arg0: i32, %arg1: i32) -> (i32, i32) {
    %c0_i32 = arith.constant 0 : i32
    %c0_i32_0 = arith.constant 0 : i32
    return %c0_i32, %arg1 : i32, i32
  }
  func.func @transform_4(%arg0: i32, %arg1: i32) -> (i32, i32) {
    %c0_i32 = arith.constant 0 : i32
    %c0_i32_0 = arith.constant 0 : i32
    return %c0_i32, %arg1 : i32, i32
  }
  func.func @transform_5(%arg0: i32, %arg1: i32) -> (i32, i32) {
    %c0_i32 = arith.constant 0 : i32
    return %arg0, %arg1 : i32, i32
  }
}

</mosaic_0001>

<llo_original>
// kernel: tpu_custom_call.1
$region0: #{tpu_custom_call.1}
  #allocation0 [shape = 'u32[]', space=smem, size = 0x4, offset = 0x4, fixed_abs, tag = 'smem constant byte address 0x4 - core index']
  #allocation1 [shape = 'u32[144,128]{1,0:T(1,128)}', space=vmem, size = 0x12000, scoped, tag = 'internal scratch']
  %s0 = inlined_call_operand.hbm [shape: f32[128,256], index: 0, kind: input, shape index: {}]
  %s1 = inlined_call_operand.hbm [shape: f32[1,256], index: 1, kind: input, shape index: {}]
  %s2 = inlined_call_operand.vmem [shape: f32[1,256], index: 2, kind: input, shape index: {}]
  %s3 = inlined_call_operand.hbm [shape: bf16[256,256], index: 3, kind: input, shape index: {}]
  %s4 = inlined_call_operand.vmem [shape: f32[1,256], index: 4, kind: input, shape index: {}]
  %s5 = inlined_call_operand.hbm [shape: f32[128,256], index: 5, kind: output, shape index: {}]
  %s6 = sld [smem:[#allocation0]]
  $region42: #{tpu_custom_call.1} parent=0
    _
  %s8 = ssub.s32 1, %s6
  %s9 = scalar_select 0, %s8, %s6
  $region1: #{tpu_custom_call.1} parent=0
    #allocation2 [shape = 'u8[131072]{0}', space=vmem, size = 0x20000, scoped, tag = 'input window, operand 0, single buffered']
    #allocation3 [shape = 's32[1]{0}', space=sflag, size = 0x4, scoped, tag = 'scoped memory for tpu_custom_call.1']
    #allocation4 [shape = 's32[1]{0}', space=sflag, size = 0x4, scoped, tag = 'scoped memory for tpu_custom_call.1']
    #allocation5 [shape = 'u8[1024]{0}', space=vmem, size = 0x400, scoped, tag = 'input window, operand 1, single buffered']
    #allocation6 [shape = 's32[1]{0}', space=sflag, size = 0x4, scoped, tag = 'scoped memory for tpu_custom_call.1']
    #allocation7 [shape = 'u8[131072]{0}', space=vmem, size = 0x20000, scoped, tag = 'input window, operand 3, single buffered']
    #allocation8 [shape = 'u8[131072]{0}', space=vmem, size = 0x20000, scoped, tag = 'output window, operand 0, single buffered']
    %10 = vsyncpa [#allocation3], 0
    %11 = vsyncpa [#allocation6], 0
    %12 = vsyncpa [#allocation4], 0
    // Predicated region
    $region2: #{tpu_custom_call.1} parent=1 // pred_check
      _
    $region3: #{tpu_custom_call.1} parent=1 // pred_check_branch
      %14 = sbr.rel (0) target = $region5
    $region4: #{tpu_custom_call.1} parent=1 // pred_region
      %s16 = ssub.s32 4096, 4096
      %17 = vsyncadd [#allocation3], %s16
      %s18 = sshll.u32 [#allocation2], 4
      %s19 = int_to_ptr.vmem [resolvable:$true] %s18
      %24 = dma.hbm_to_vmem [thread:$0]  %s0, 4096, %s19, [#allocation3], 256, 256, 16
    $region5: #{tpu_custom_call.1} parent=1 // pred_fallthru
      _
    // Predicated region
    $region6: #{tpu_custom_call.1} parent=1 // pred_check
      _
    $region7: #{tpu_custom_call.1} parent=1 // pred_check_branch
      %26 = sbr.rel (0) target = $region9
    $region8: #{tpu_custom_call.1} parent=1 // pred_region
      %s28 = ssub.s32 32, 32
      %29 = vsyncadd [#allocation6], %s28
      %s31 = sshll.u32 [#allocation5], 4
      %s32 = int_to_ptr.vmem [resolvable:$true] %s31
      %34 = dma.hbm_to_vmem [thread:$0]  %s1, 32, %s32, [#allocation6]
    $region9: #{tpu_custom_call.1} parent=1 // pred_fallthru
      _
    // Predicated region
    $region10: #{tpu_custom_call.1} parent=1 // pred_check
      _
    $region11: #{tpu_custom_call.1} parent=1 // pred_check_branch
      %36 = sbr.rel (0) target = $region13
    $region12: #{tpu_custom_call.1} parent=1 // pred_region
      _
    $region13: #{tpu_custom_call.1} parent=1 // pred_fallthru
      _
    // Predicated region
    $region14: #{tpu_custom_call.1} parent=1 // pred_check
      _
    $region15: #{tpu_custom_call.1} parent=1 // pred_check_branch
      %38 = sbr.rel (0) target = $region17
    $region16: #{tpu_custom_call.1} parent=1 // pred_region
      %s40 = ssub.s32 4096, 4096
      %41 = vsyncadd [#allocation6], %s40
      %s42 = sshll.u32 [#allocation7], 4
      %s43 = int_to_ptr.vmem [resolvable:$true] %s42
      %48 = dma.hbm_to_vmem [thread:$0]  %s3, 4096, %s43, [#allocation6], 128, 128, 8
    $region17: #{tpu_custom_call.1} parent=1 // pred_fallthru
      _
    // Predicated region
    $region18: #{tpu_custom_call.1} parent=1 // pred_check
      _
    $region19: #{tpu_custom_call.1} parent=1 // pred_check_branch
      %50 = sbr.rel (0) target = $region21
    $region20: #{tpu_custom_call.1} parent=1 // pred_region
      _
    $region21: #{tpu_custom_call.1} parent=1 // pred_fallthru
      _
    // Predicated region
    $region22: #{tpu_custom_call.1} parent=1 // pred_check
      _
    $region23: #{tpu_custom_call.1} parent=1 // pred_check_branch
      %52 = sbr.rel (0) target = $region25
    $region24: #{tpu_custom_call.1} parent=1 // pred_region
      %53 = dma.done [#allocation3], 4096
    $region25: #{tpu_custom_call.1} parent=1 // pred_fallthru
      _
    // Predicated region
    $region26: #{tpu_custom_call.1} parent=1 // pred_check
      _
    $region27: #{tpu_custom_call.1} parent=1 // pred_check_branch
      %55 = sbr.rel (0) target = $region29
    $region28: #{tpu_custom_call.1} parent=1 // pred_region
      %56 = dma.done [#allocation6], 32
    $region29: #{tpu_custom_call.1} parent=1 // pred_fallthru
      _
    // Predicated region
    $region30: #{tpu_custom_call.1} parent=1 // pred_check
      _
    $region31: #{tpu_custom_call.1} parent=1 // pred_check_branch
      %58 = sbr.rel (0) target = $region33
    $region32: #{tpu_custom_call.1} parent=1 // pred_region
      %59 = dma.done [#allocation6], 4096
    $region33: #{tpu_custom_call.1} parent=1 // pred_fallthru
      _
    %v60 = vld [vmem:[#allocation2] sm:$0xff]
    %v61 = vld [vmem:[#allocation2 + $0x8] sm:$0xff]
    %v62 = vld [vmem:[#allocation2 + $0x10] sm:$0xff]
    %v63 = vld [vmem:[#allocation2 + $0x18] sm:$0xff]
    %v64 = vld [vmem:[#allocation2 + $0x20] sm:$0xff]
    %v65 = vld [vmem:[#allocation2 + $0x28] sm:$0xff]
    %v66 = vld [vmem:[#allocation2 + $0x30] sm:$0xff]
    %v67 = vld [vmem:[#allocation2 + $0x38] sm:$0xff]
    %v68 = vld [vmem:[#allocation2 + $0x40] sm:$0xff]
    %v69 = vld [vmem:[#allocation2 + $0x48] sm:$0xff]
    %v70 = vld [vmem:[#allocation2 + $0x50] sm:$0xff]
    %v71 = vld [vmem:[#allocation2 + $0x58] sm:$0xff]
    %v72 = vld [vmem:[#allocation2 + $0x60] sm:$0xff]
    %v73 = vld [vmem:[#allocation2 + $0x68] sm:$0xff]
    %v74 = vld [vmem:[#allocation2 + $0x70] sm:$0xff]
    %v75 = vld [vmem:[#allocation2 + $0x78] sm:$0xff]
    %v76 = vld [vmem:[#allocation2 + $0x80] sm:$0xff]
    %v77 = vld [vmem:[#allocation2 + $0x88] sm:$0xff]
    %v78 = vld [vmem:[#allocation2 + $0x90] sm:$0xff]
    %v79 = vld [vmem:[#allocation2 + $0x98] sm:$0xff]
    %v80 = vld [vmem:[#allocation2 + $0xa0] sm:$0xff]
    %v81 = vld [vmem:[#allocation2 + $0xa8] sm:$0xff]
    %v82 = vld [vmem:[#allocation2 + $0xb0] sm:$0xff]
    %v83 = vld [vmem:[#allocation2 + $0xb8] sm:$0xff]
    %v84 = vld [vmem:[#allocation2 + $0xc0] sm:$0xff]
    %v85 = vld [vmem:[#allocation2 + $0xc8] sm:$0xff]
    %v86 = vld [vmem:[#allocation2 + $0xd0] sm:$0xff]
    %v87 = vld [vmem:[#allocation2 + $0xd8] sm:$0xff]
    %v88 = vld [vmem:[#allocation2 + $0xe0] sm:$0xff]
    %v89 = vld [vmem:[#allocation2 + $0xe8] sm:$0xff]
    %v90 = vld [vmem:[#allocation2 + $0xf0] sm:$0xff]
    %v91 = vld [vmem:[#allocation2 + $0xf8] sm:$0xff]
    %v92 = vadd.f32 %v60, %v61
    %93 = vadd.xlane.f32.xlu0 %v92
    %v94 = vpop.xlane.xlu0 %93
    %v95 = vadd.f32 %v62, %v63
    %96 = vadd.xlane.f32.xlu0 %v95
    %v97 = vpop.xlane.xlu0 %96
    %v98 = vadd.f32 %v64, %v65
    %99 = vadd.xlane.f32.xlu0 %v98
    %v100 = vpop.xlane.xlu0 %99
    %v101 = vadd.f32 %v66, %v67
    %102 = vadd.xlane.f32.xlu0 %v101
    %v103 = vpop.xlane.xlu0 %102
    %v104 = vadd.f32 %v68, %v69
    %105 = vadd.xlane.f32.xlu0 %v104
    %v106 = vpop.xlane.xlu0 %105
    %v107 = vadd.f32 %v70, %v71
    %108 = vadd.xlane.f32.xlu0 %v107
    %v109 = vpop.xlane.xlu0 %108
    %v110 = vadd.f32 %v72, %v73
    %111 = vadd.xlane.f32.xlu0 %v110
    %v112 = vpop.xlane.xlu0 %111
    %v113 = vadd.f32 %v74, %v75
    %114 = vadd.xlane.f32.xlu0 %v113
    %v115 = vpop.xlane.xlu0 %114
    %v116 = vadd.f32 %v76, %v77
    %117 = vadd.xlane.f32.xlu0 %v116
    %v118 = vpop.xlane.xlu0 %117
    %v119 = vadd.f32 %v78, %v79
    %120 = vadd.xlane.f32.xlu0 %v119
    %v121 = vpop.xlane.xlu0 %120
    %v122 = vadd.f32 %v80, %v81
    %123 = vadd.xlane.f32.xlu0 %v122
    %v124 = vpop.xlane.xlu0 %123
    %v125 = vadd.f32 %v82, %v83
    %126 = vadd.xlane.f32.xlu0 %v125
    %v127 = vpop.xlane.xlu0 %126
    %v128 = vadd.f32 %v84, %v85
    %129 = vadd.xlane.f32.xlu0 %v128
    %v130 = vpop.xlane.xlu0 %129
    %v131 = vadd.f32 %v86, %v87
    %132 = vadd.xlane.f32.xlu0 %v131
    %v133 = vpop.xlane.xlu0 %132
    %v134 = vadd.f32 %v88, %v89
    %135 = vadd.xlane.f32.xlu0 %v134
    %v136 = vpop.xlane.xlu0 %135
    %v137 = vadd.f32 %v90, %v91
    %138 = vadd.xlane.f32.xlu0 %v137
    %v139 = vpop.xlane.xlu0 %138
    %v140 = vmul.f32 %v94, 0.00390625
    %v141 = vmul.f32 %v97, 0.00390625
    %v142 = vmul.f32 %v100, 0.00390625
    %v143 = vmul.f32 %v103, 0.00390625
    %v144 = vmul.f32 %v106, 0.00390625
    %v145 = vmul.f32 %v109, 0.00390625
    %v146 = vmul.f32 %v112, 0.00390625
    %v147 = vmul.f32 %v115, 0.00390625
    %v148 = vmul.f32 %v118, 0.00390625
    %v149 = vmul.f32 %v121, 0.00390625
    %v150 = vmul.f32 %v124, 0.00390625
    %v151 = vmul.f32 %v127, 0.00390625
    %v152 = vmul.f32 %v130, 0.00390625
    %v153 = vmul.f32 %v133, 0.00390625
    %v154 = vmul.f32 %v136, 0.00390625
    %v155 = vmul.f32 %v139, 0.00390625
    %v156 = vsub.f32 %v60, %v140
    %v157 = vsub.f32 %v61, %v140
    %v158 = vsub.f32 %v62, %v141
    %v159 = vsub.f32 %v63, %v141
    %v160 = vsub.f32 %v64, %v142
    %v161 = vsub.f32 %v65, %v142
    %v162 = vsub.f32 %v66, %v143
    %v163 = vsub.f32 %v67, %v143
    %v164 = vsub.f32 %v68, %v144
    %v165 = vsub.f32 %v69, %v144
    %v166 = vsub.f32 %v70, %v145
    %v167 = vsub.f32 %v71, %v145
    %v168 = vsub.f32 %v72, %v146
    %v169 = vsub.f32 %v73, %v146
    %v170 = vsub.f32 %v74, %v147
    %v171 = vsub.f32 %v75, %v147
    %v172 = vsub.f32 %v76, %v148
    %v173 = vsub.f32 %v77, %v148
    %v174 = vsub.f32 %v78, %v149
    %v175 = vsub.f32 %v79, %v149
    %v176 = vsub.f32 %v80, %v150
    %v177 = vsub.f32 %v81, %v150
    %v178 = vsub.f32 %v82, %v151
    %v179 = vsub.f32 %v83, %v151
    %v180 = vsub.f32 %v84, %v152
    %v181 = vsub.f32 %v85, %v152
    %v182 = vsub.f32 %v86, %v153
    %v183 = vsub.f32 %v87, %v153
    %v184 = vsub.f32 %v88, %v154
    %v185 = vsub.f32 %v89, %v154
    %v186 = vsub.f32 %v90, %v155
    %v187 = vsub.f32 %v91, %v155
    %v188 = vmul.f32 %v156, %v156
    %v189 = vmul.f32 %v157, %v157
    %v190 = vmul.f32 %v158, %v158
    %v191 = vmul.f32 %v159, %v159
    %v192 = vmul.f32 %v160, %v160
    %v193 = vmul.f32 %v161, %v161
    %v194 = vmul.f32 %v162, %v162
    %v195 = vmul.f32 %v163, %v163
    %v196 = vmul.f32 %v164, %v164
    %v197 = vmul.f32 %v165, %v165
    %v198 = vmul.f32 %v166, %v166
    %v199 = vmul.f32 %v167, %v167
    %v200 = vmul.f32 %v168, %v168
    %v201 = vmul.f32 %v169, %v169
    %v202 = vmul.f32 %v170, %v170
    %v203 = vmul.f32 %v171, %v171
    %v204 = vmul.f32 %v172, %v172
    %v205 = vmul.f32 %v173, %v173
    %v206 = vmul.f32 %v174, %v174
    %v207 = vmul.f32 %v175, %v175
    %v208 = vmul.f32 %v176, %v176
    %v209 = vmul.f32 %v177, %v177
    %v210 = vmul.f32 %v178, %v178
    %v211 = vmul.f32 %v179, %v179
    %v212 = vmul.f32 %v180, %v180
    %v213 = vmul.f32 %v181, %v181
    %v214 = vmul.f32 %v182, %v182
    %v215 = vmul.f32 %v183, %v183
    %v216 = vmul.f32 %v184, %v184
    %v217 = vmul.f32 %v185, %v185
    %v218 = vmul.f32 %v186, %v186
    %v219 = vmul.f32 %v187, %v187
    %v220 = vadd.f32 %v188, %v189
    %221 = vadd.xlane.f32.xlu0 %v220
    %v222 = vpop.xlane.xlu0 %221
    %v223 = vadd.f32 %v190, %v191
    %224 = vadd.xlane.f32.xlu0 %v223
    %v225 = vpop.xlane.xlu0 %224
    %v226 = vadd.f32 %v192, %v193
    %227 = vadd.xlane.f32.xlu0 %v226
    %v228 = vpop.xlane.xlu0 %227
    %v229 = vadd.f32 %v194, %v195
    %230 = vadd.xlane.f32.xlu0 %v229
    %v231 = vpop.xlane.xlu0 %230
    %v232 = vadd.f32 %v196, %v197
    %233 = vadd.xlane.f32.xlu0 %v232
    %v234 = vpop.xlane.xlu0 %233
    %v235 = vadd.f32 %v198, %v199
    %236 = vadd.xlane.f32.xlu0 %v235
    %v237 = vpop.xlane.xlu0 %236
    %v238 = vadd.f32 %v200, %v201
    %239 = vadd.xlane.f32.xlu0 %v238
    %v240 = vpop.xlane.xlu0 %239
    %v241 = vadd.f32 %v202, %v203
    %242 = vadd.xlane.f32.xlu0 %v241
    %v243 = vpop.xlane.xlu0 %242
    %v244 = vadd.f32 %v204, %v205
    %245 = vadd.xlane.f32.xlu0 %v244
    %v246 = vpop.xlane.xlu0 %245
    %v247 = vadd.f32 %v206, %v207
    %248 = vadd.xlane.f32.xlu0 %v247
    %v249 = vpop.xlane.xlu0 %248
    %v250 = vadd.f32 %v208, %v209
    %251 = vadd.xlane.f32.xlu0 %v250
    %v252 = vpop.xlane.xlu0 %251
    %v253 = vadd.f32 %v210, %v211
    %254 = vadd.xlane.f32.xlu0 %v253
    %v255 = vpop.xlane.xlu0 %254
    %v256 = vadd.f32 %v212, %v213
    %257 = vadd.xlane.f32.xlu0 %v256
    %v258 = vpop.xlane.xlu0 %257
    %v259 = vadd.f32 %v214, %v215
    %260 = vadd.xlane.f32.xlu0 %v259
    %v261 = vpop.xlane.xlu0 %260
    %v262 = vadd.f32 %v216, %v217
    %263 = vadd.xlane.f32.xlu0 %v262
    %v264 = vpop.xlane.xlu0 %263
    %v265 = vadd.f32 %v218, %v219
    %266 = vadd.xlane.f32.xlu0 %v265
    %v267 = vpop.xlane.xlu0 %266
    %v268 = vmul.f32 %v222, 0.00390625
    %v269 = vmul.f32 %v225, 0.00390625
    %v270 = vmul.f32 %v228, 0.00390625
    %v271 = vmul.f32 %v231, 0.00390625
    %v272 = vmul.f32 %v234, 0.00390625
    %v273 = vmul.f32 %v237, 0.00390625
    %v274 = vmul.f32 %v240, 0.00390625
    %v275 = vmul.f32 %v243, 0.00390625
    %v276 = vmul.f32 %v246, 0.00390625
    %v277 = vmul.f32 %v249, 0.00390625
    %v278 = vmul.f32 %v252, 0.00390625
    %v279 = vmul.f32 %v255, 0.00390625
    %v280 = vmul.f32 %v258, 0.00390625
    %v281 = vmul.f32 %v261, 0.00390625
    %v282 = vmul.f32 %v264, 0.00390625
    %v283 = vmul.f32 %v267, 0.00390625
    %v284 = vadd.f32 %v268, 1e-05
    %v285 = vadd.f32 %v269, 1e-05
    %v286 = vadd.f32 %v270, 1e-05
    %v287 = vadd.f32 %v271, 1e-05
    %v288 = vadd.f32 %v272, 1e-05
    %v289 = vadd.f32 %v273, 1e-05
    %v290 = vadd.f32 %v274, 1e-05
    %v291 = vadd.f32 %v275, 1e-05
    %v292 = vadd.f32 %v276, 1e-05
    %v293 = vadd.f32 %v277, 1e-05
    %v294 = vadd.f32 %v278, 1e-05
    %v295 = vadd.f32 %v279, 1e-05
    %v296 = vadd.f32 %v280, 1e-05
    %v297 = vadd.f32 %v281, 1e-05
    %v298 = vadd.f32 %v282, 1e-05
    %v299 = vadd.f32 %v283, 1e-05
    %v300 = vrsqrt.pop %v284
    %v301 = vrsqrt.pop %v285
    %v302 = vrsqrt.pop %v286
    %v303 = vrsqrt.pop %v287
    %v304 = vrsqrt.pop %v288
    %v305 = vrsqrt.pop %v289
    %v306 = vrsqrt.pop %v290
    %v307 = vrsqrt.pop %v291
    %v308 = vrsqrt.pop %v292
    %v309 = vrsqrt.pop %v293
    %v310 = vrsqrt.pop %v294
    %v311 = vrsqrt.pop %v295
    %v312 = vrsqrt.pop %v296
    %v313 = vrsqrt.pop %v297
    %v314 = vrsqrt.pop %v298
    %v315 = vrsqrt.pop %v299
    %v316 = vmul.f32 %v156, %v300
    %v317 = vmul.f32 %v157, %v300
    %v318 = vmul.f32 %v158, %v301
    %v319 = vmul.f32 %v159, %v301
    %v320 = vmul.f32 %v160, %v302
    %v321 = vmul.f32 %v161, %v302
    %v322 = vmul.f32 %v162, %v303
    %v323 = vmul.f32 %v163, %v303
    %v324 = vmul.f32 %v164, %v304
    %v325 = vmul.f32 %v165, %v304
    %v326 = vmul.f32 %v166, %v305
    %v327 = vmul.f32 %v167, %v305
    %v328 = vmul.f32 %v168, %v306
    %v329 = vmul.f32 %v169, %v306
    %v330 = vmul.f32 %v170, %v307
    %v331 = vmul.f32 %v171, %v307
    %v332 = vmul.f32 %v172, %v308
    %v333 = vmul.f32 %v173, %v308
    %v334 = vmul.f32 %v174, %v309
    %v335 = vmul.f32 %v175, %v309
    %v336 = vmul.f32 %v176, %v310
    %v337 = vmul.f32 %v177, %v310
    %v338 = vmul.f32 %v178, %v311
    %v339 = vmul.f32 %v179, %v311
    %v340 = vmul.f32 %v180, %v312
    %v341 = vmul.f32 %v181, %v312
    %v342 = vmul.f32 %v182, %v313
    %v343 = vmul.f32 %v183, %v313
    %v344 = vmul.f32 %v184, %v314
    %v345 = vmul.f32 %v185, %v314
    %v346 = vmul.f32 %v186, %v315
    %v347 = vmul.f32 %v187, %v315
    %v348 = vld [vmem:[#allocation5] sm:$0x3]
    %v350 = vlaneseq
    %v351 = vshrl.u32 %v350, 7
    %v352 = vsub.s32 0, %v351
    %v353 = vrot.slane %v348, %v352
    %v354 = vlaneseq
    %v355 = vshrl.u32 %v354, 7
    %v356 = vsub.s32 1, %v355
    %v357 = vrot.slane %v348, %v356
    %v360 = vmul.f32 %v316, %v353
    %v361 = vmul.f32 %v317, %v357
    %v362 = vmul.f32 %v318, %v353
    %v363 = vmul.f32 %v319, %v357
    %v364 = vmul.f32 %v320, %v353
    %v365 = vmul.f32 %v321, %v357
    %v366 = vmul.f32 %v322, %v353
    %v367 = vmul.f32 %v323, %v357
    %v368 = vmul.f32 %v324, %v353
    %v369 = vmul.f32 %v325, %v357
    %v370 = vmul.f32 %v326, %v353
    %v371 = vmul.f32 %v327, %v357
    %v372 = vmul.f32 %v328, %v353
    %v373 = vmul.f32 %v329, %v357
    %v374 = vmul.f32 %v330, %v353
    %v375 = vmul.f32 %v331, %v357
    %v376 = vmul.f32 %v332, %v353
    %v377 = vmul.f32 %v333, %v357
    %v378 = vmul.f32 %v334, %v353
    %v379 = vmul.f32 %v335, %v357
    %v380 = vmul.f32 %v336, %v353
    %v381 = vmul.f32 %v337, %v357
    %v382 = vmul.f32 %v338, %v353
    %v383 = vmul.f32 %v339, %v357
    %v384 = vmul.f32 %v340, %v353
    %v385 = vmul.f32 %v341, %v357
    %v386 = vmul.f32 %v342, %v353
    %v387 = vmul.f32 %v343, %v357
    %v388 = vmul.f32 %v344, %v353
    %v389 = vmul.f32 %v345, %v357
    %v390 = vmul.f32 %v346, %v353
    %v391 = vmul.f32 %v347, %v357
    %v392 = vld [vmem:[%s2] sm:$0x3]
    %v394 = vlaneseq
    %v395 = vshrl.u32 %v394, 7
    %v396 = vsub.s32 0, %v395
    %v397 = vrot.slane %v392, %v396
    %v398 = vlaneseq
    %v399 = vshrl.u32 %v398, 7
    %v400 = vsub.s32 1, %v399
    %v401 = vrot.slane %v392, %v400
    %v404 = vadd.f32 %v360, %v397
    %v405 = vadd.f32 %v361, %v401
    %v406 = vadd.f32 %v362, %v397
    %v407 = vadd.f32 %v363, %v401
    %v408 = vadd.f32 %v364, %v397
    %v409 = vadd.f32 %v365, %v401
    %v410 = vadd.f32 %v366, %v397
    %v411 = vadd.f32 %v367, %v401
    %v412 = vadd.f32 %v368, %v397
    %v413 = vadd.f32 %v369, %v401
    %v414 = vadd.f32 %v370, %v397
    %v415 = vadd.f32 %v371, %v401
    %v416 = vadd.f32 %v372, %v397
    %v417 = vadd.f32 %v373, %v401
    %v418 = vadd.f32 %v374, %v397
    %v419 = vadd.f32 %v375, %v401
    %v420 = vadd.f32 %v376, %v397
    %v421 = vadd.f32 %v377, %v401
    %v422 = vadd.f32 %v378, %v397
    %v423 = vadd.f32 %v379, %v401
    %v424 = vadd.f32 %v380, %v397
    %v425 = vadd.f32 %v381, %v401
    %v426 = vadd.f32 %v382, %v397
    %v427 = vadd.f32 %v383, %v401
    %v428 = vadd.f32 %v384, %v397
    %v429 = vadd.f32 %v385, %v401
    %v430 = vadd.f32 %v386, %v397
    %v431 = vadd.f32 %v387, %v401
    %v432 = vadd.f32 %v388, %v397
    %v433 = vadd.f32 %v389, %v401
    %v434 = vadd.f32 %v390, %v397
    %v435 = vadd.f32 %v391, %v401
    %v436 = vpack.c.bf16 %v406, %v404
    %v437 = vpack.c.bf16 %v407, %v405
    %v438 = vpack.c.bf16 %v410, %v408
    %v439 = vpack.c.bf16 %v411, %v409
    %v440 = vpack.c.bf16 %v414, %v412
    %v441 = vpack.c.bf16 %v415, %v413
    %v442 = vpack.c.bf16 %v418, %v416
    %v443 = vpack.c.bf16 %v419, %v417
    %v444 = vpack.c.bf16 %v422, %v420
    %v445 = vpack.c.bf16 %v423, %v421
    %v446 = vpack.c.bf16 %v426, %v424
    %v447 = vpack.c.bf16 %v427, %v425
    %v448 = vpack.c.bf16 %v430, %v428
    %v449 = vpack.c.bf16 %v431, %v429
    %v450 = vpack.c.bf16 %v434, %v432
    %v451 = vpack.c.bf16 %v435, %v433
    %v452 = vld [vmem:[#allocation7] sm:$0xff]
    %v453 = vld [vmem:[#allocation7 + $0x8] sm:$0xff]
    %v454 = vld [vmem:[#allocation7 + $0x10] sm:$0xff]
    %v455 = vld [vmem:[#allocation7 + $0x18] sm:$0xff]
    %v456 = vld [vmem:[#allocation7 + $0x20] sm:$0xff]
    %v457 = vld [vmem:[#allocation7 + $0x28] sm:$0xff]
    %v458 = vld [vmem:[#allocation7 + $0x30] sm:$0xff]
    %v459 = vld [vmem:[#allocation7 + $0x38] sm:$0xff]
    %v460 = vld [vmem:[#allocation7 + $0x40] sm:$0xff]
    %v461 = vld [vmem:[#allocation7 + $0x48] sm:$0xff]
    %v462 = vld [vmem:[#allocation7 + $0x50] sm:$0xff]
    %v463 = vld [vmem:[#allocation7 + $0x58] sm:$0xff]
    %v464 = vld [vmem:[#allocation7 + $0x60] sm:$0xff]
    %v465 = vld [vmem:[#allocation7 + $0x68] sm:$0xff]
    %v466 = vld [vmem:[#allocation7 + $0x70] sm:$0xff]
    %v467 = vld [vmem:[#allocation7 + $0x78] sm:$0xff]
    %v468 = vld [vmem:[#allocation7 + $0x80] sm:$0xff]
    %v469 = vld [vmem:[#allocation7 + $0x88] sm:$0xff]
    %v470 = vld [vmem:[#allocation7 + $0x90] sm:$0xff]
    %v471 = vld [vmem:[#allocation7 + $0x98] sm:$0xff]
    %v472 = vld [vmem:[#allocation7 + $0xa0] sm:$0xff]
    %v473 = vld [vmem:[#allocation7 + $0xa8] sm:$0xff]
    %v474 = vld [vmem:[#allocation7 + $0xb0] sm:$0xff]
    %v475 = vld [vmem:[#allocation7 + $0xb8] sm:$0xff]
    %v476 = vld [vmem:[#allocation7 + $0xc0] sm:$0xff]
    %v477 = vld [vmem:[#allocation7 + $0xc8] sm:$0xff]
    %v478 = vld [vmem:[#allocation7 + $0xd0] sm:$0xff]
    %v479 = vld [vmem:[#allocation7 + $0xd8] sm:$0xff]
    %v480 = vld [vmem:[#allocation7 + $0xe0] sm:$0xff]
    %v481 = vld [vmem:[#allocation7 + $0xe8] sm:$0xff]
    %v482 = vld [vmem:[#allocation7 + $0xf0] sm:$0xff]
    %v483 = vld [vmem:[#allocation7 + $0xf8] sm:$0xff]
    %v484 = vld [vmem:[%s4] sm:$0x3]
    %v486 = vlaneseq
    %v487 = vshrl.u32 %v486, 7
    %v488 = vsub.s32 0, %v487
    %v489 = vrot.slane %v484, %v488
    %v490 = vlaneseq
    %v491 = vshrl.u32 %v490, 7
    %v492 = vsub.s32 1, %v491
    %v493 = vrot.slane %v484, %v492
    %v528 = vunpack.c.l.b16 %v452
    %v529 = vunpack.c.h.b16 %v452
    %v530 = vunpack.c.l.b16 %v453
    %v531 = vunpack.c.h.b16 %v453
    %v532 = vunpack.c.l.b16 %v454
    %v533 = vunpack.c.h.b16 %v454
    %v534 = vunpack.c.l.b16 %v455
    %v535 = vunpack.c.h.b16 %v455
    %v536 = vunpack.c.l.b16 %v456
    %v537 = vunpack.c.h.b16 %v456
    %v538 = vunpack.c.l.b16 %v457
    %v539 = vunpack.c.h.b16 %v457
    %v540 = vunpack.c.l.b16 %v458
    %v541 = vunpack.c.h.b16 %v458
    %v542 = vunpack.c.l.b16 %v459
    %v543 = vunpack.c.h.b16 %v459
    %v544 = vunpack.c.l.b16 %v460
    %v545 = vunpack.c.h.b16 %v460
    %v546 = vunpack.c.l.b16 %v461
    %v547 = vunpack.c.h.b16 %v461
    %v548 = vunpack.c.l.b16 %v462
    %v549 = vunpack.c.h.b16 %v462
    %v550 = vunpack.c.l.b16 %v463
    %v551 = vunpack.c.h.b16 %v463
    %v552 = vunpack.c.l.b16 %v464
    %v553 = vunpack.c.h.b16 %v464
    %v554 = vunpack.c.l.b16 %v465
    %v555 = vunpack.c.h.b16 %v465
    %v556 = vunpack.c.l.b16 %v466
    %v557 = vunpack.c.h.b16 %v466
    %v558 = vunpack.c.l.b16 %v467
    %v559 = vunpack.c.h.b16 %v467
    %v560 = vunpack.c.l.b16 %v468
    %v561 = vunpack.c.h.b16 %v468
    %v562 = vunpack.c.l.b16 %v469
    %v563 = vunpack.c.h.b16 %v469
    %v564 = vunpack.c.l.b16 %v470
    %v565 = vunpack.c.h.b16 %v470
    %v566 = vunpack.c.l.b16 %v471
    %v567 = vunpack.c.h.b16 %v471
    %v568 = vunpack.c.l.b16 %v472
    %v569 = vunpack.c.h.b16 %v472
    %v570 = vunpack.c.l.b16 %v473
    %v571 = vunpack.c.h.b16 %v473
    %v572 = vunpack.c.l.b16 %v474
    %v573 = vunpack.c.h.b16 %v474
    %v574 = vunpack.c.l.b16 %v475
    %v575 = vunpack.c.h.b16 %v475
    %v576 = vunpack.c.l.b16 %v476
    %v577 = vunpack.c.h.b16 %v476
    %v578 = vunpack.c.l.b16 %v477
    %v579 = vunpack.c.h.b16 %v477
    %v580 = vunpack.c.l.b16 %v478
    %v581 = vunpack.c.h.b16 %v478
    %v582 = vunpack.c.l.b16 %v479
    %v583 = vunpack.c.h.b16 %v479
    %v584 = vunpack.c.l.b16 %v480
    %v585 = vunpack.c.h.b16 %v480
    %v586 = vunpack.c.l.b16 %v481
    %v587 = vunpack.c.h.b16 %v481
    %v588 = vunpack.c.l.b16 %v482
    %v589 = vunpack.c.h.b16 %v482
    %v590 = vunpack.c.l.b16 %v483
    %v591 = vunpack.c.h.b16 %v483
    %v592 = vpack.c.b16 %v530, %v528
    %v593 = vpack.c.b16 %v531, %v529
    %v594 = vpack.c.b16 %v534, %v532
    %v595 = vpack.c.b16 %v535, %v533
    %v596 = vpack.c.b16 %v538, %v536
    %v597 = vpack.c.b16 %v539, %v537
    %v598 = vpack.c.b16 %v542, %v540
    %v599 = vpack.c.b16 %v543, %v541
    %v600 = vpack.c.b16 %v546, %v544
    %v601 = vpack.c.b16 %v547, %v545
    %v602 = vpack.c.b16 %v550, %v548
    %v603 = vpack.c.b16 %v551, %v549
    %v604 = vpack.c.b16 %v554, %v552
    %v605 = vpack.c.b16 %v555, %v553
    %v606 = vpack.c.b16 %v558, %v556
    %v607 = vpack.c.b16 %v559, %v557
    %v608 = vpack.c.b16 %v562, %v560
    %v609 = vpack.c.b16 %v563, %v561
    %v610 = vpack.c.b16 %v566, %v564
    %v611 = vpack.c.b16 %v567, %v565
    %v612 = vpack.c.b16 %v570, %v568
    %v613 = vpack.c.b16 %v571, %v569
    %v614 = vpack.c.b16 %v574, %v572
    %v615 = vpack.c.b16 %v575, %v573
    %v616 = vpack.c.b16 %v578, %v576
    %v617 = vpack.c.b16 %v579, %v577
    %v618 = vpack.c.b16 %v582, %v580
    %v619 = vpack.c.b16 %v583, %v581
    %v620 = vpack.c.b16 %v586, %v584
    %v621 = vpack.c.b16 %v587, %v585
    %v622 = vpack.c.b16 %v590, %v588
    %v623 = vpack.c.b16 %v591, %v589
    %656 = vmatprep.subr.bf16.mxu0 %v607
    %657 = vmatpush1.bf16.msra.mxu0 %v606
    %658 = vmatprep.subr.bf16.mxu0 %v605
    %659 = vmatpush1.bf16.msra.mxu0 %v604
    %660 = vmatprep.subr.bf16.mxu0 %v603
    %661 = vmatpush1.bf16.msra.mxu0 %v602
    %662 = vmatprep.subr.bf16.mxu0 %v601
    %663 = vmatpush1.bf16.msra.mxu0 %v600
    %664 = vmatprep.subr.bf16.mxu0 %v599
    %665 = vmatpush1.bf16.msra.mxu0 %v598
    %666 = vmatprep.subr.bf16.mxu0 %v597
    %667 = vmatpush1.bf16.msra.mxu0 %v596
    %668 = vmatprep.subr.bf16.mxu0 %v595
    %669 = vmatpush1.bf16.msra.mxu0 %v594
    %670 = vmatprep.subr.bf16.mxu0 %v593
    %671 = vmatpush1.bf16.msra.mxu0 %v592
    %672 = vmatprep.subr.bf16.mxu0 %v623
    %673 = vmatpush2.bf16.msra.mxu0 %v622
    %674 = vmatprep.subr.bf16.mxu0 %v621
    %675 = vmatpush2.bf16.msra.mxu0 %v620
    %676 = vmatprep.subr.bf16.mxu0 %v619
    %677 = vmatpush2.bf16.msra.mxu0 %v618
    %678 = vmatprep.subr.bf16.mxu0 %v617
    %679 = vmatpush2.bf16.msra.mxu0 %v616
    %680 = vmatprep.subr.bf16.mxu0 %v615
    %681 = vmatpush2.bf16.msra.mxu0 %v614
    %682 = vmatprep.subr.bf16.mxu0 %v613
    %683 = vmatpush2.bf16.msra.mxu0 %v612
    %684 = vmatprep.subr.bf16.mxu0 %v611
    %685 = vmatpush2.bf16.msra.mxu0 %v610
    %686 = vmatprep.subr.bf16.mxu0 %v609
    %687 = vmatpush2.bf16.msra.mxu0 %v608
    %688 = vmatprep.mubr.bf16.mxu0 %v437
    %689 = vmatmul.mubr.bf16.gmra.mxu0 %v436
    %v690 = vpop.f32.mrf.mxu0
    %v691 = vadd.f32 %v489, %v690
    %v692 = vpop.f32.mrf.mxu0
    %v693 = vadd.f32 %v493, %v692
    %v694 = vpop.f32.mrf.mxu0
    %v695 = vadd.f32 %v489, %v694
    %v696 = vpop.f32.mrf.mxu0
    %v697 = vadd.f32 %v493, %v696
    %698 = vmatprep.mubr.bf16.mxu0 %v439
    %699 = vmatmul.mubr.bf16.gmra.mxu0 %v438
    %v700 = vpop.f32.mrf.mxu0
    %v701 = vadd.f32 %v489, %v700
    %v702 = vpop.f32.mrf.mxu0
    %v703 = vadd.f32 %v493, %v702
    %v704 = vpop.f32.mrf.mxu0
    %v705 = vadd.f32 %v489, %v704
    %v706 = vpop.f32.mrf.mxu0
    %v707 = vadd.f32 %v493, %v706
    %708 = vmatprep.mubr.bf16.mxu0 %v441
    %709 = vmatmul.mubr.bf16.gmra.mxu0 %v440
    %v710 = vpop.f32.mrf.mxu0
    %v711 = vadd.f32 %v489, %v710
    %v712 = vpop.f32.mrf.mxu0
    %v713 = vadd.f32 %v493, %v712
    %v714 = vpop.f32.mrf.mxu0
    %v715 = vadd.f32 %v489, %v714
    %v716 = vpop.f32.mrf.mxu0
    %v717 = vadd.f32 %v493, %v716
    %718 = vmatprep.mubr.bf16.mxu0 %v443
    %719 = vmatmul.mubr.bf16.gmra.mxu0 %v442
    %v720 = vpop.f32.mrf.mxu0
    %v721 = vadd.f32 %v489, %v720
    %v722 = vpop.f32.mrf.mxu0
    %v723 = vadd.f32 %v493, %v722
    %v724 = vpop.f32.mrf.mxu0
    %v725 = vadd.f32 %v489, %v724
    %v726 = vpop.f32.mrf.mxu0
    %v727 = vadd.f32 %v493, %v726
    %728 = vmatprep.mubr.bf16.mxu0 %v445
    %729 = vmatmul.mubr.bf16.gmra.mxu0 %v444
    %v730 = vpop.f32.mrf.mxu0
    %v731 = vadd.f32 %v489, %v730
    %v732 = vpop.f32.mrf.mxu0
    %v733 = vadd.f32 %v493, %v732
    %v734 = vpop.f32.mrf.mxu0
    %v735 = vadd.f32 %v489, %v734
    %v736 = vpop.f32.mrf.mxu0
    %v737 = vadd.f32 %v493, %v736
    %738 = vmatprep.mubr.bf16.mxu0 %v447
    %739 = vmatmul.mubr.bf16.gmra.mxu0 %v446
    %v740 = vpop.f32.mrf.mxu0
    %v741 = vadd.f32 %v489, %v740
    %v742 = vpop.f32.mrf.mxu0
    %v743 = vadd.f32 %v493, %v742
    %v744 = vpop.f32.mrf.mxu0
    %v745 = vadd.f32 %v489, %v744
    %v746 = vpop.f32.mrf.mxu0
    %v747 = vadd.f32 %v493, %v746
    %748 = vmatprep.mubr.bf16.mxu0 %v449
    %749 = vmatmul.mubr.bf16.gmra.mxu0 %v448
    %v750 = vpop.f32.mrf.mxu0
    %v751 = vadd.f32 %v489, %v750
    %v752 = vpop.f32.mrf.mxu0
    %v753 = vadd.f32 %v493, %v752
    %v754 = vpop.f32.mrf.mxu0
    %v755 = vadd.f32 %v489, %v754
    %v756 = vpop.f32.mrf.mxu0
    %v757 = vadd.f32 %v493, %v756
    %758 = vmatprep.mubr.bf16.mxu0 %v451
    %759 = vmatmul.mubr.bf16.gmra.mxu0 %v450
    %v760 = vpop.f32.mrf.mxu0
    %v761 = vadd.f32 %v489, %v760
    %v762 = vpop.f32.mrf.mxu0
    %v763 = vadd.f32 %v493, %v762
    %v764 = vpop.f32.mrf.mxu0
    %v765 = vadd.f32 %v489, %v764
    %v766 = vpop.f32.mrf.mxu0
    %v767 = vadd.f32 %v493, %v766
    %768 = vdwg.mxu0
    %v769 = vadd.f32 %v60, %v691
    %v770 = vadd.f32 %v61, %v693
    %v771 = vadd.f32 %v62, %v695
    %v772 = vadd.f32 %v63, %v697
    %v773 = vadd.f32 %v64, %v701
    %v774 = vadd.f32 %v65, %v703
    %v775 = vadd.f32 %v66, %v705
    %v776 = vadd.f32 %v67, %v707
    %v777 = vadd.f32 %v68, %v711
    %v778 = vadd.f32 %v69, %v713
    %v779 = vadd.f32 %v70, %v715
    %v780 = vadd.f32 %v71, %v717
    %v781 = vadd.f32 %v72, %v721
    %v782 = vadd.f32 %v73, %v723
    %v783 = vadd.f32 %v74, %v725
    %v784 = vadd.f32 %v75, %v727
    %v785 = vadd.f32 %v76, %v731
    %v786 = vadd.f32 %v77, %v733
    %v787 = vadd.f32 %v78, %v735
    %v788 = vadd.f32 %v79, %v737
    %v789 = vadd.f32 %v80, %v741
    %v790 = vadd.f32 %v81, %v743
    %v791 = vadd.f32 %v82, %v745
    %v792 = vadd.f32 %v83, %v747
    %v793 = vadd.f32 %v84, %v751
    %v794 = vadd.f32 %v85, %v753
    %v795 = vadd.f32 %v86, %v755
    %v796 = vadd.f32 %v87, %v757
    %v797 = vadd.f32 %v88, %v761
    %v798 = vadd.f32 %v89, %v763
    %v799 = vadd.f32 %v90, %v765
    %v800 = vadd.f32 %v91, %v767
    %801 = vst [vmem:[#allocation8] sm:$0xff] %v769
    %802 = vst [vmem:[#allocation8 + $0x8] sm:$0xff] %v770
    %803 = vst [vmem:[#allocation8 + $0x10] sm:$0xff] %v771
    %804 = vst [vmem:[#allocation8 + $0x18] sm:$0xff] %v772
    %805 = vst [vmem:[#allocation8 + $0x20] sm:$0xff] %v773
    %806 = vst [vmem:[#allocation8 + $0x28] sm:$0xff] %v774
    %807 = vst [vmem:[#allocation8 + $0x30] sm:$0xff] %v775
    %808 = vst [vmem:[#allocation8 + $0x38] sm:$0xff] %v776
    %809 = vst [vmem:[#allocation8 + $0x40] sm:$0xff] %v777
    %810 = vst [vmem:[#allocation8 + $0x48] sm:$0xff] %v778
    %811 = vst [vmem:[#allocation8 + $0x50] sm:$0xff] %v779
    %812 = vst [vmem:[#allocation8 + $0x58] sm:$0xff] %v780
    %813 = vst [vmem:[#allocation8 + $0x60] sm:$0xff] %v781
    %814 = vst [vmem:[#allocation8 + $0x68] sm:$0xff] %v782
    %815 = vst [vmem:[#allocation8 + $0x70] sm:$0xff] %v783
    %816 = vst [vmem:[#allocation8 + $0x78] sm:$0xff] %v784
    %817 = vst [vmem:[#allocation8 + $0x80] sm:$0xff] %v785
    %818 = vst [vmem:[#allocation8 + $0x88] sm:$0xff] %v786
    %819 = vst [vmem:[#allocation8 + $0x90] sm:$0xff] %v787
    %820 = vst [vmem:[#allocation8 + $0x98] sm:$0xff] %v788
    %821 = vst [vmem:[#allocation8 + $0xa0] sm:$0xff] %v789
    %822 = vst [vmem:[#allocation8 + $0xa8] sm:$0xff] %v790
    %823 = vst [vmem:[#allocation8 + $0xb0] sm:$0xff] %v791
    %824 = vst [vmem:[#allocation8 + $0xb8] sm:$0xff] %v792
    %825 = vst [vmem:[#allocation8 + $0xc0] sm:$0xff] %v793
    %826 = vst [vmem:[#allocation8 + $0xc8] sm:$0xff] %v794
    %827 = vst [vmem:[#allocation8 + $0xd0] sm:$0xff] %v795
    %828 = vst [vmem:[#allocation8 + $0xd8] sm:$0xff] %v796
    %829 = vst [vmem:[#allocation8 + $0xe0] sm:$0xff] %v797
    %830 = vst [vmem:[#allocation8 + $0xe8] sm:$0xff] %v798
    %831 = vst [vmem:[#allocation8 + $0xf0] sm:$0xff] %v799
    %832 = vst [vmem:[#allocation8 + $0xf8] sm:$0xff] %v800
    // Predicated region
    $region34: #{tpu_custom_call.1} parent=1 // pred_check
      _
    $region35: #{tpu_custom_call.1} parent=1 // pred_check_branch
      %834 = sbr.rel (0) target = $region37
    $region36: #{tpu_custom_call.1} parent=1 // pred_region
      %s836 = ssub.s32 4096, 4096
      %837 = vsyncadd [#allocation4], %s836
      %s838 = sshll.u32 [#allocation8], 4
      %s839 = int_to_ptr.vmem [resolvable:$true] %s838
      %844 = dma.vmem_to_hbm [thread:$0]  %s839, 4096, %s5, [#allocation4], 256, 256, 16
    $region37: #{tpu_custom_call.1} parent=1 // pred_fallthru
      _
    // Predicated region
    $region38: #{tpu_custom_call.1} parent=1 // pred_check
      _
    $region39: #{tpu_custom_call.1} parent=1 // pred_check_branch
      %846 = sbr.rel (0) target = $region41
    $region40: #{tpu_custom_call.1} parent=1 // pred_region
      %847 = dma.done [#allocation4], 4096
    $region41: #{tpu_custom_call.1} parent=1 // pred_fallthru
      _
    %848 = vsyncpa [#allocation3], 1
    %849 = vsyncpa [#allocation6], 1
    %850 = vsyncpa [#allocation4], 1

</llo_original>
